<compile_context>
chip_gen: v5e
topology: v5e:2x2
jax: 0.10.0
libtpu: 0.0.40
codegen_flags: <defaults>
</compile_context>

<pallas_src>
import functools
import math

import numpy as np

import jax
import jax.numpy as jnp
from jax.experimental import pallas as pl
from jax.experimental.pallas import tpu as pltpu

GAMMA = 0.99
EPS = 1e-6
NEG_SLOPE = 0.01  # torch.nn.functional.leaky_relu default
LOG_SQRT_2PI = 0.5 * math.log(2.0 * math.pi)


# ----------------------------- Fused kernel: MLP + Normal log-prob + discounted return + loss -----------------------------
def reinforce_fused_kernel(s_ref, a_ref, r_ref, g_ref,
                           w1_ref, b1_ref, w2_ref, b2_ref, w3_ref, b3_ref,
                           lp_ref, loss_ref):
    # Layout: time T on the lane axis; features/hidden on sublanes.
    x = s_ref[0]                                                          # (obs, T)

    # Policy MLP (weights are (out, in), so layer = W @ x + b).
    h1 = jnp.dot(w1_ref[...], x, preferred_element_type=jnp.float32) + b1_ref[...]   # (16, T)
    h1 = jnp.where(h1 > 0, h1, NEG_SLOPE * h1)                            # leaky_relu
    h2 = jnp.dot(w2_ref[...], h1, preferred_element_type=jnp.float32) + b2_ref[...]  # (32, T)
    h2 = jnp.where(h2 > 0, h2, NEG_SLOPE * h2)                            # leaky_relu
    out3 = jnp.dot(w3_ref[...], h2, preferred_element_type=jnp.float32) + b3_ref[...]  # (2*act, T)

    # Head split is a sublane slice (lane axis stays full-width).
    act = out3.shape[0] // 2
    mean = out3[:act, :] + EPS                                            # (act, T)
    raw = out3[act:, :]                                                   # (act, T)
    # softplus(raw) + eps, numerically stable form.
    std = jnp.where(raw > 0, raw, 0.0) + jnp.log1p(jnp.exp(-jnp.abs(raw))) + EPS

    # Normal log-prob of the taken action; the module uses log_prob(action)[0] (first action dim).
    a = a_ref[0]                                                          # (act, T)
    lp = -((a - mean) ** 2) / (2.0 * std * std) - jnp.log(std) - LOG_SQRT_2PI
    lp0 = lp[0:1, :]                                                      # (1, T), lane-dense
    lp_ref[...] = lp0.reshape(1, 1, lp0.shape[-1])

    # Discounted returns: returns[i] = sum_{j>=i} gamma^(j-i) * r[j]  ==  r @ G  with
    # G[j, i] = gamma^(j-i) (precomputed host-side, grid-resident).
    r = r_ref[0]                                                          # (1, T)
    returns = jnp.dot(r, g_ref[...], preferred_element_type=jnp.float32)  # (1, T)

    t = returns.shape[-1]
    loss = -jnp.sum(lp0 * returns) * (1.0 / t)                            # -mean(lp * returns)
    loss_ref[...] = jnp.reshape(loss, (1, 1, 1))


# ----------------------------- Wrapper -----------------------------
@jax.jit
def reinforce_forward(states, actions, rewards, params, gamma_mat):
    """states: (B, T, obs); actions: (B, T, act); rewards: (B, T).

    Returns (log_probs (B, T), loss (B,)) -- one REINFORCE loss per episode.
    """
    w1, b1, w2, b2, w3, b3 = params
    B, T, OBS = states.shape
    ACT = actions.shape[-1]

    # Put time on the lane (last) axis once, outside the kernel.
    s_t = jnp.swapaxes(states, 1, 2)                  # (B, obs, T)
    a_t = jnp.swapaxes(actions, 1, 2)                 # (B, act, T)
    r_t = rewards.reshape(B, 1, T)                    # (B, 1, T)

    ep_map3 = lambda b: (b, 0, 0)                     # per-episode blocks
    const2 = lambda b: (0, 0)                         # grid-invariant (weights stay resident)

    in_specs = [
        pl.BlockSpec((1, OBS, T), ep_map3),           # states
        pl.BlockSpec((1, ACT, T), ep_map3),           # actions
        pl.BlockSpec((1, 1, T), ep_map3),             # rewards
        pl.BlockSpec((T, T), const2),                 # discount matrix
        pl.BlockSpec(w1.shape, const2),
        pl.BlockSpec(b1.shape, const2),
        pl.BlockSpec(w2.shape, const2),
        pl.BlockSpec(b2.shape, const2),
        pl.BlockSpec(w3.shape, const2),
        pl.BlockSpec(b3.shape, const2),
    ]
    out_specs = (
        pl.BlockSpec((1, 1, T), ep_map3),             # per-step log-probs (lane-dense)
        pl.BlockSpec((1, 1, 1), ep_map3),             # per-episode scalar loss
    )
    out_shape = (
        jax.ShapeDtypeStruct((B, 1, T), jnp.float32),
        jax.ShapeDtypeStruct((B, 1, 1), jnp.float32),
    )

    lp, loss = pl.pallas_call(
        reinforce_fused_kernel,
        grid=(B,),
        in_specs=in_specs,
        out_specs=out_specs,
        out_shape=out_shape,
        compiler_params=pltpu.CompilerParams(
            dimension_semantics=("parallel",),        # episode axis -> both TCs on v7x
        ),
    )(s_t, a_t, r_t, gamma_mat, w1, b1, w2, b2, w3, b3)

    return lp[:, 0, :], loss[:, 0, 0]


def make_discount_matrix(T, gamma):
    """G[j, i] = gamma^(j-i) for j >= i else 0, so that (r @ G)[i] = sum_{j>=i} gamma^(j-i) r[j]."""
    idx = np.arange(T)
    diff = idx[:, None] - idx[None, :]
    g = np.where(diff >= 0, np.power(gamma, np.maximum(diff, 0)), 0.0)
    return jnp.asarray(g, jnp.float32)


# ----------------------------- Parameter init (PyTorch-Linear-like, stored (out, in)) -----------------------------
def init_linear(key, fan_in, fan_out):
    k = 1.0 / math.sqrt(fan_in)
    kw, kb = jax.random.split(key)
    w = jax.random.uniform(kw, (fan_out, fan_in), jnp.float32, minval=-k, maxval=k)
    b = jax.random.uniform(kb, (fan_out, 1), jnp.float32, minval=-k, maxval=k)
    return w, b


# ----------------------------- Reference (numpy, float64) -----------------------------
def np_reference(states, actions, rewards, params):
    w1, b1, w2, b2, w3, b3 = [np.asarray(p, dtype=np.float64) for p in params]
    x = np.asarray(states, np.float64)                # (T, obs)
    h1 = x @ w1.T + b1.T
    h1 = np.where(h1 > 0, h1, NEG_SLOPE * h1)
    h2 = h1 @ w2.T + b2.T
    h2 = np.where(h2 > 0, h2, NEG_SLOPE * h2)
    out = h2 @ w3.T + b3.T                            # (T, 2*act)
    d = out.shape[-1] // 2
    mean = out[:, :d] + EPS
    raw = out[:, d:]
    std = np.maximum(raw, 0.0) + np.log1p(np.exp(-np.abs(raw))) + EPS
    a = np.asarray(actions, np.float64)
    lp = -((a - mean) ** 2) / (2.0 * std * std) - np.log(std) - LOG_SQRT_2PI
    lp = lp[:, 0]                                     # module: distrib.log_prob(action)[0]
    r = np.asarray(rewards, np.float64)
    T = r.shape[0]
    ret = np.zeros(T)
    acc = 0.0
    for i in range(T - 1, -1, -1):
        acc = r[i] + GAMMA * acc
        ret[i] = acc
    loss = -np.mean(lp * ret)
    return lp, loss


if __name__ == "__main__":
    # InvertedPendulum-v5: obs_space_dims=4, action_space_dims=1; B=2 episodes of T=8 steps.
    OBS, ACT, T, B = 4, 1, 8, 2
    key = jax.random.PRNGKey(0)
    k_states, k_actions, k_rewards, k1, k2, k3 = jax.random.split(key, 6)

    w1, b1 = init_linear(k1, OBS, 16)
    w2, b2 = init_linear(k2, 16, 32)
    w3, b3 = init_linear(k3, 32, 2 * ACT)
    params = (w1, b1, w2, b2, w3, b3)

    states = jax.random.normal(k_states, (B, T, OBS), jnp.float32)
    actions = jax.random.normal(k_actions, (B, T, ACT), jnp.float32)
    rewards = jnp.ones((B, T), jnp.float32) + 0.1 * jax.random.normal(k_rewards, (B, T), jnp.float32)

    gamma_mat = make_discount_matrix(T, GAMMA)        # hoisted: built once, reused across calls

    log_probs, loss = reinforce_forward(states, actions, rewards, params, gamma_mat)
    log_probs = jax.block_until_ready(log_probs)
    loss = jax.block_until_ready(loss)

    for b in range(B):
        lp_ref, loss_ref = np_reference(states[b], actions[b], rewards[b], params)
        np.testing.assert_allclose(np.asarray(log_probs[b]), lp_ref, rtol=1e-4, atol=1e-5)
        np.testing.assert_allclose(float(loss[b]), loss_ref, rtol=1e-4, atol=1e-5)

    print("KERNEL_OK")
</pallas_src>

<mosaic_0001>
module attributes {stable_mosaic.version = 11 : i64} {
  func.func @reinforce_fused_kernel(%arg0: i32, %arg1: memref<1x4x8xf32, #tpu.memory_space<vmem>>, %arg2: memref<1x1x8xf32, #tpu.memory_space<vmem>>, %arg3: memref<1x1x8xf32, #tpu.memory_space<vmem>>, %arg4: memref<8x8xf32, #tpu.memory_space<vmem>>, %arg5: memref<16x4xf32, #tpu.memory_space<vmem>>, %arg6: memref<16x1xf32, #tpu.memory_space<vmem>>, %arg7: memref<32x16xf32, #tpu.memory_space<vmem>>, %arg8: memref<32x1xf32, #tpu.memory_space<vmem>>, %arg9: memref<2x32xf32, #tpu.memory_space<vmem>>, %arg10: memref<2x1xf32, #tpu.memory_space<vmem>>, %arg11: memref<1x1x8xf32, #tpu.memory_space<vmem>>, %arg12: memref<1x1x1xf32, #tpu.memory_space<vmem>>) attributes {dimension_semantics = [#tpu.dimension_semantics<parallel>], iteration_bounds = array<i64: 2>, scalar_prefetch = 0 : i64, scratch_operands = 0 : i64, tpu.core_type = #tpu.core_type<tc>, window_params = [{transform_indices = @transform_0, window_bounds = array<i64: 1, 4, 8>}, {transform_indices = @transform_1, window_bounds = array<i64: 1, 1, 8>}, {transform_indices = @transform_2, window_bounds = array<i64: 1, 1, 8>}, {pipeline_mode = #tpu.pipeline_mode<synchronous>, transform_indices = @transform_3, window_bounds = array<i64: 8, 8>}, {pipeline_mode = #tpu.pipeline_mode<synchronous>, transform_indices = @transform_4, window_bounds = array<i64: 16, 4>}, {pipeline_mode = #tpu.pipeline_mode<synchronous>, transform_indices = @transform_5, window_bounds = array<i64: 16, 1>}, {pipeline_mode = #tpu.pipeline_mode<synchronous>, transform_indices = @transform_6, window_bounds = array<i64: 32, 16>}, {pipeline_mode = #tpu.pipeline_mode<synchronous>, transform_indices = @transform_7, window_bounds = array<i64: 32, 1>}, {pipeline_mode = #tpu.pipeline_mode<synchronous>, transform_indices = @transform_8, window_bounds = array<i64: 2, 32>}, {pipeline_mode = #tpu.pipeline_mode<synchronous>, transform_indices = @transform_9, window_bounds = array<i64: 2, 1>}, {transform_indices = @transform_10, window_bounds = array<i64: 1, 1, 8>}, {transform_indices = @transform_11, window_bounds = array<i64: 1, 1, 1>}]} {
    %c0 = arith.constant 0 : index
    %c0_0 = arith.constant 0 : index
    %c0_1 = arith.constant 0 : index
    %0 = vector.load %arg1[%c0, %c0_0, %c0_1] : memref<1x4x8xf32, #tpu.memory_space<vmem>>, vector<1x4x8xf32>
    %1 = vector.shape_cast %0 : vector<1x4x8xf32> to vector<4x8xf32>
    %c0_2 = arith.constant 0 : index
    %c0_3 = arith.constant 0 : index
    %2 = vector.load %arg5[%c0_2, %c0_3] : memref<16x4xf32, #tpu.memory_space<vmem>>, vector<16x4xf32>
    %cst = arith.constant dense<0.000000e+00> : vector<16x8xf32>
    %3 = tpu.matmul %2, %1, %cst {dimension_numbers = #tpu.dot_dimension_numbers<[1], [0], [0], [1], [0, 0, 1, 1], [], []>} : vector<16x4xf32>, vector<4x8xf32>, vector<16x8xf32> -> vector<16x8xf32>
    %c0_4 = arith.constant 0 : index
    %c0_5 = arith.constant 0 : index
    %4 = vector.load %arg6[%c0_4, %c0_5] : memref<16x1xf32, #tpu.memory_space<vmem>>, vector<16x1xf32>
    %5 = vector.broadcast %4 : vector<16x1xf32> to vector<16x8xf32>
    %6 = arith.addf %3, %5 : vector<16x8xf32>
    %cst_6 = arith.constant 0.000000e+00 : f32
    %7 = vector.broadcast %cst_6 : f32 to vector<16x8xf32>
    %8 = arith.cmpf ogt, %6, %7 : vector<16x8xf32>
    %cst_7 = arith.constant 0.00999999977 : f32
    %9 = vector.broadcast %cst_7 : f32 to vector<16x8xf32>
    %10 = arith.mulf %9, %6 : vector<16x8xf32>
    %11 = arith.select %8, %6, %10 : vector<16x8xi1>, vector<16x8xf32>
    %c0_8 = arith.constant 0 : index
    %c0_9 = arith.constant 0 : index
    %12 = vector.load %arg7[%c0_8, %c0_9] : memref<32x16xf32, #tpu.memory_space<vmem>>, vector<32x16xf32>
    %cst_10 = arith.constant dense<0.000000e+00> : vector<32x8xf32>
    %13 = tpu.matmul %12, %11, %cst_10 {dimension_numbers = #tpu.dot_dimension_numbers<[1], [0], [0], [1], [0, 0, 1, 1], [], []>} : vector<32x16xf32>, vector<16x8xf32>, vector<32x8xf32> -> vector<32x8xf32>
    %c0_11 = arith.constant 0 : index
    %c0_12 = arith.constant 0 : index
    %14 = vector.load %arg8[%c0_11, %c0_12] : memref<32x1xf32, #tpu.memory_space<vmem>>, vector<32x1xf32>
    %15 = vector.broadcast %14 : vector<32x1xf32> to vector<32x8xf32>
    %16 = arith.addf %13, %15 : vector<32x8xf32>
    %cst_13 = arith.constant 0.000000e+00 : f32
    %17 = vector.broadcast %cst_13 : f32 to vector<32x8xf32>
    %18 = arith.cmpf ogt, %16, %17 : vector<32x8xf32>
    %cst_14 = arith.constant 0.00999999977 : f32
    %19 = vector.broadcast %cst_14 : f32 to vector<32x8xf32>
    %20 = arith.mulf %19, %16 : vector<32x8xf32>
    %21 = arith.select %18, %16, %20 : vector<32x8xi1>, vector<32x8xf32>
    %c0_15 = arith.constant 0 : index
    %c0_16 = arith.constant 0 : index
    %22 = vector.load %arg9[%c0_15, %c0_16] : memref<2x32xf32, #tpu.memory_space<vmem>>, vector<2x32xf32>
    %cst_17 = arith.constant dense<0.000000e+00> : vector<2x8xf32>
    %23 = tpu.matmul %22, %21, %cst_17 {dimension_numbers = #tpu.dot_dimension_numbers<[1], [0], [0], [1], [0, 0, 1, 1], [], []>} : vector<2x32xf32>, vector<32x8xf32>, vector<2x8xf32> -> vector<2x8xf32>
    %c0_18 = arith.constant 0 : index
    %c0_19 = arith.constant 0 : index
    %24 = vector.load %arg10[%c0_18, %c0_19] : memref<2x1xf32, #tpu.memory_space<vmem>>, vector<2x1xf32>
    %25 = vector.broadcast %24 : vector<2x1xf32> to vector<2x8xf32>
    %26 = arith.addf %23, %25 : vector<2x8xf32>
    %27 = vector.extract_strided_slice %26 {offsets = [0, 0], sizes = [1, 8], strides = [1, 1]} : vector<2x8xf32> to vector<1x8xf32>
    %cst_20 = arith.constant 9.99999997E-7 : f32
    %28 = vector.broadcast %cst_20 : f32 to vector<1x8xf32>
    %29 = arith.addf %27, %28 : vector<1x8xf32>
    %30 = vector.extract_strided_slice %26 {offsets = [1, 0], sizes = [1, 8], strides = [1, 1]} : vector<2x8xf32> to vector<1x8xf32>
    %cst_21 = arith.constant 0.000000e+00 : f32
    %31 = vector.broadcast %cst_21 : f32 to vector<1x8xf32>
    %32 = arith.cmpf ogt, %30, %31 : vector<1x8xf32>
    %cst_22 = arith.constant 0.000000e+00 : f32
    %33 = vector.broadcast %cst_22 : f32 to vector<1x8xf32>
    %34 = arith.select %32, %30, %33 : vector<1x8xi1>, vector<1x8xf32>
    %35 = math.absf %30 : vector<1x8xf32>
    %cst_23 = arith.constant 0.000000e+00 : f32
    %36 = vector.broadcast %cst_23 : f32 to vector<1x8xf32>
    %37 = arith.subf %36, %35 : vector<1x8xf32>
    %38 = math.exp %37 : vector<1x8xf32>
    %39 = math.log1p %38 : vector<1x8xf32>
    %40 = arith.addf %34, %39 : vector<1x8xf32>
    %cst_24 = arith.constant 9.99999997E-7 : f32
    %41 = vector.broadcast %cst_24 : f32 to vector<1x8xf32>
    %42 = arith.addf %40, %41 : vector<1x8xf32>
    %c0_25 = arith.constant 0 : index
    %c0_26 = arith.constant 0 : index
    %c0_27 = arith.constant 0 : index
    %43 = vector.load %arg2[%c0_25, %c0_26, %c0_27] : memref<1x1x8xf32, #tpu.memory_space<vmem>>, vector<1x1x8xf32>
    %44 = vector.shape_cast %43 : vector<1x1x8xf32> to vector<1x8xf32>
    %45 = arith.subf %44, %29 : vector<1x8xf32>
    %46 = arith.mulf %45, %45 : vector<1x8xf32>
    %cst_28 = arith.constant 0.000000e+00 : f32
    %47 = vector.broadcast %cst_28 : f32 to vector<1x8xf32>
    %48 = arith.subf %47, %46 : vector<1x8xf32>
    %cst_29 = arith.constant 2.000000e+00 : f32
    %49 = vector.broadcast %cst_29 : f32 to vector<1x8xf32>
    %50 = arith.mulf %49, %42 : vector<1x8xf32>
    %51 = arith.mulf %50, %42 : vector<1x8xf32>
    %52 = arith.divf %48, %51 : vector<1x8xf32>
    %53 = math.log %42 : vector<1x8xf32>
    %54 = arith.subf %52, %53 : vector<1x8xf32>
    %cst_30 = arith.constant 0.918938517 : f32
    %55 = vector.broadcast %cst_30 : f32 to vector<1x8xf32>
    %56 = arith.subf %54, %55 : vector<1x8xf32>
    %57 = vector.shape_cast %56 : vector<1x8xf32> to vector<1x1x8xf32>
    %c0_31 = arith.constant 0 : index
    %c0_32 = arith.constant 0 : index
    %c0_33 = arith.constant 0 : index
    %58 = vector.load %arg11[%c0_31, %c0_32, %c0_33] : memref<1x1x8xf32, #tpu.memory_space<vmem>>, vector<1x1x8xf32>
    tpu.vector_store %arg11[%c0_31, %c0_32, %c0_33], %57 {strides = array<i32>} : memref<1x1x8xf32, #tpu.memory_space<vmem>>, vector<1x1x8xf32>,
    %c0_34 = arith.constant 0 : index
    %c0_35 = arith.constant 0 : index
    %c0_36 = arith.constant 0 : index
    %59 = vector.load %arg3[%c0_34, %c0_35, %c0_36] : memref<1x1x8xf32, #tpu.memory_space<vmem>>, vector<1x1x8xf32>
    %60 = vector.shape_cast %59 : vector<1x1x8xf32> to vector<1x8xf32>
    %c0_37 = arith.constant 0 : index
    %c0_38 = arith.constant 0 : index
    %61 = vector.load %arg4[%c0_37, %c0_38] : memref<8x8xf32, #tpu.memory_space<vmem>>, vector<8x8xf32>
    %cst_39 = arith.constant dense<0.000000e+00> : vector<1x8xf32>
    %62 = tpu.matmul %60, %61, %cst_39 {dimension_numbers = #tpu.dot_dimension_numbers<[1], [0], [0], [1], [0, 0, 1, 1], [], []>} : vector<1x8xf32>, vector<8x8xf32>, vector<1x8xf32> -> vector<1x8xf32>
    %63 = arith.mulf %56, %62 : vector<1x8xf32>
    %64 = vector.shape_cast %63 : vector<1x8xf32> to vector<1x1x8xf32>
    %cst_40 = arith.constant dense<0.000000e+00> : vector<1xf32>
    %65 = vector.multi_reduction <add>, %64, %cst_40 [1, 2] : vector<1x1x8xf32> to vector<1xf32>
    %66 = vector.shape_cast %65 : vector<1xf32> to vector<1x1x1xf32>
    %67 = vector.extract %66[0, 0, 0] : f32 from vector<1x1x1xf32>
    %cst_41 = arith.constant 0.000000e+00 : f32
    %68 = arith.subf %cst_41, %67 : f32
    %cst_42 = arith.constant 1.250000e-01 : f32
    %69 = arith.mulf %68, %cst_42 : f32
    %70 = vector.broadcast %69 : f32 to vector<1x1x1xf32>
    %c0_43 = arith.constant 0 : index
    %c0_44 = arith.constant 0 : index
    %c0_45 = arith.constant 0 : index
    %71 = vector.load %arg12[%c0_43, %c0_44, %c0_45] : memref<1x1x1xf32, #tpu.memory_space<vmem>>, vector<1x1x1xf32>
    tpu.vector_store %arg12[%c0_43, %c0_44, %c0_45], %70 {strides = array<i32>} : memref<1x1x1xf32, #tpu.memory_space<vmem>>, vector<1x1x1xf32>,
    return
  }
  func.func @transform_0(%arg0: i32) -> (i32, i32, i32) {
    %c0_i32 = arith.constant 0 : i32
    %c0_i32_0 = arith.constant 0 : i32
    %c0_i32_1 = arith.constant 0 : i32
    return %arg0, %c0_i32, %c0_i32_0 : i32, i32, i32
  }
  func.func @transform_1(%arg0: i32) -> (i32, i32, i32) {
    %c0_i32 = arith.constant 0 : i32
    %c0_i32_0 = arith.constant 0 : i32
    %c0_i32_1 = arith.constant 0 : i32
    return %arg0, %c0_i32, %c0_i32_0 : i32, i32, i32
  }
  func.func @transform_2(%arg0: i32) -> (i32, i32, i32) {
    %c0_i32 = arith.constant 0 : i32
    %c0_i32_0 = arith.constant 0 : i32
    %c0_i32_1 = arith.constant 0 : i32
    return %arg0, %c0_i32, %c0_i32_0 : i32, i32, i32
  }
  func.func @transform_3(%arg0: i32) -> (i32, i32) {
    %c0_i32 = arith.constant 0 : i32
    %c0_i32_0 = arith.constant 0 : i32
    %c0_i32_1 = arith.constant 0 : i32
    return %c0_i32, %c0_i32_0 : i32, i32
  }
  func.func @transform_4(%arg0: i32) -> (i32, i32) {
    %c0_i32 = arith.constant 0 : i32
    %c0_i32_0 = arith.constant 0 : i32
    %c0_i32_1 = arith.constant 0 : i32
    return %c0_i32, %c0_i32_0 : i32, i32
  }
  func.func @transform_5(%arg0: i32) -> (i32, i32) {
    %c0_i32 = arith.constant 0 : i32
    %c0_i32_0 = arith.constant 0 : i32
    %c0_i32_1 = arith.constant 0 : i32
    return %c0_i32, %c0_i32_0 : i32, i32
  }
  func.func @transform_6(%arg0: i32) -> (i32, i32) {
    %c0_i32 = arith.constant 0 : i32
    %c0_i32_0 = arith.constant 0 : i32
    %c0_i32_1 = arith.constant 0 : i32
    return %c0_i32, %c0_i32_0 : i32, i32
  }
  func.func @transform_7(%arg0: i32) -> (i32, i32) {
    %c0_i32 = arith.constant 0 : i32
    %c0_i32_0 = arith.constant 0 : i32
    %c0_i32_1 = arith.constant 0 : i32
    return %c0_i32, %c0_i32_0 : i32, i32
  }
  func.func @transform_8(%arg0: i32) -> (i32, i32) {
    %c0_i32 = arith.constant 0 : i32
    %c0_i32_0 = arith.constant 0 : i32
    %c0_i32_1 = arith.constant 0 : i32
    return %c0_i32, %c0_i32_0 : i32, i32
  }
  func.func @transform_9(%arg0: i32) -> (i32, i32) {
    %c0_i32 = arith.constant 0 : i32
    %c0_i32_0 = arith.constant 0 : i32
    %c0_i32_1 = arith.constant 0 : i32
    return %c0_i32, %c0_i32_0 : i32, i32
  }
  func.func @transform_10(%arg0: i32) -> (i32, i32, i32) {
    %c0_i32 = arith.constant 0 : i32
    %c0_i32_0 = arith.constant 0 : i32
    %c0_i32_1 = arith.constant 0 : i32
    return %arg0, %c0_i32, %c0_i32_0 : i32, i32, i32
  }
  func.func @transform_11(%arg0: i32) -> (i32, i32, i32) {
    %c0_i32 = arith.constant 0 : i32
    %c0_i32_0 = arith.constant 0 : i32
    %c0_i32_1 = arith.constant 0 : i32
    return %arg0, %c0_i32, %c0_i32_0 : i32, i32, i32
  }
}

</mosaic_0001>

<llo_original>
// kernel: reinforce_forward.1
$region0: #{reinforce_forward.1}
  #allocation0 [shape = 'u32[]', space=smem, size = 0x4, offset = 0x4, fixed_abs, tag = 'smem constant byte address 0x4 - core index']
  #allocation1 [shape = 'u32[72,128]{1,0:T(1,128)}', space=vmem, size = 0x9000, scoped, tag = 'internal scratch']
  %s0 = inlined_call_operand.vmem [shape: f32[2,4,8], index: 0, kind: input, shape index: {}]
  %s1 = inlined_call_operand.vmem [shape: f32[2,1,8], index: 1, kind: input, shape index: {}]
  %s2 = inlined_call_operand.vmem [shape: f32[2,1,8], index: 2, kind: input, shape index: {}]
  %s3 = inlined_call_operand.vmem [shape: f32[8,8], index: 3, kind: input, shape index: {}]
  %s4 = inlined_call_operand.vmem [shape: f32[16,4], index: 4, kind: input, shape index: {}]
  %s5 = inlined_call_operand.vmem [shape: f32[16,1], index: 5, kind: input, shape index: {}]
  %s6 = inlined_call_operand.vmem [shape: f32[32,16], index: 6, kind: input, shape index: {}]
  %s7 = inlined_call_operand.vmem [shape: f32[32,1], index: 7, kind: input, shape index: {}]
  %s8 = inlined_call_operand.vmem [shape: f32[2,32], index: 8, kind: input, shape index: {}]
  %s9 = inlined_call_operand.vmem [shape: f32[2,1], index: 9, kind: input, shape index: {}]
  %s10 = inlined_call_operand.hbm [shape: f32[2,1,8], index: 10, kind: output, shape index: {0}]
  %s11 = inlined_call_operand.vmem [shape: f32[2,1,1], index: 11, kind: output, shape index: {1}]
  %12 = xla_tuple %s10, %s11
  %s13 = sld [smem:[#allocation0]]
  $region81: #{reinforce_forward.1} parent=0
    _
  %s15 = ssub.s32 1, %s13
  %s16 = scalar_select 0, %s15, %s13
  $region1: #{reinforce_forward.1} parent=0
    #allocation2 [shape = 'u8[1024]{0}', space=vmem, size = 0x400, scoped, tag = 'output window, operand 0']
    #allocation3 [shape = 's32[2]{0}', space=sflag, size = 0x8, scoped, tag = 'scoped memory for reinforce_forward.1']
    %17 = vsyncpa [#allocation3], 0
    %s18 = scalar_lea.sflag [#allocation3], 1
    %19 = vsyncpa %s18, 0
    loop: start=0, step=1, limit=4
    $region2: #{reinforce_forward.1} parent=1 // loop_pre_header
      _
    $region3: #{reinforce_forward.1} parent=1 // loop_header
      %s21 = sphi 0, %s25
      %p22 = scmp.ge.s32.totalorder %s21, 4
      %s31 = sphi 0, %s33
      %s34 = sphi 0, %s31
      %s35 = sphi 0, %s34
      %s51 = sphi 0, %s35
      %s57 = sphi 0, %s59
      %s60 = sphi 0, %s57
      %s61 = sphi 0, %s60
      %s77 = sphi 0, %s61
      %s83 = sphi 0, %s85
      %s86 = sphi 0, %s83
      %s87 = sphi 0, %s86
      %s103 = sphi 0, %s87
      %s107 = sphi 0, %s107
      %s109 = sphi 0, %s107
      %s110 = sphi 0, %s109
      %s124 = sphi 0, %s110
      %s128 = sphi 0, %s128
      %s130 = sphi 0, %s128
      %s131 = sphi 0, %s130
      %s145 = sphi 0, %s131
      %s149 = sphi 0, %s149
      %s151 = sphi 0, %s149
      %s152 = sphi 0, %s151
      %s166 = sphi 0, %s152
      %s170 = sphi 0, %s170
      %s172 = sphi 0, %s170
      %s173 = sphi 0, %s172
      %s187 = sphi 0, %s173
      %s191 = sphi 0, %s191
      %s193 = sphi 0, %s191
      %s194 = sphi 0, %s193
      %s208 = sphi 0, %s194
      %s212 = sphi 0, %s212
      %s214 = sphi 0, %s212
      %s215 = sphi 0, %s214
      %s229 = sphi 0, %s215
      %s233 = sphi 0, %s233
      %s235 = sphi 0, %s233
      %s236 = sphi 0, %s235
      %s250 = sphi 0, %s236
      %s256 = sphi 0, %s258
      %s259 = sphi 0, %s256
      %s260 = sphi 0, %s259
      %s276 = sphi 0, %s260
      %s282 = sphi 0, %s284
      %s285 = sphi 0, %s282
      %s286 = sphi 0, %s285
      %s302 = sphi 0, %s286
    $region4: #{reinforce_forward.1} parent=1 // loop_header_branch
      %24 = sbr.rel (%p22) target = $region8
    $region5: #{reinforce_forward.1} parent=1 // loop_body
      %s26 = ssub.s32 %s21, 1
      %s27 = ssub.s32 %s21, 2
      %s28 = sadd.s32 %s21, 1
      %s29 = ssub.s32 %s21, %s28
      %p30 = scmp.eq.s32.totalorder %s29, 0
      %s32 = sadd.s32 %s31, 1
      %s33 = scalar_select %p30, %s31, %s32
      %p36 = pneg %p30
      %p37 = scmp.eq.s32.totalorder %s21, 1
      %p38 = por %p36, %p37
      %p39 = scmp.ne.s32.totalorder %s31, %s34
      %p40 = scmp.eq.s32.totalorder %s21, 0
      %p41 = por %p39, %p40
      %p42 = scmp.ne.s32.totalorder %s31, %s34
      %p43 = scmp.eq.s32.totalorder %s26, 1
      %p44 = por %p42, %p43
      %p45 = scmp.ne.s32.totalorder %s34, %s35
      %p46 = scmp.eq.s32.totalorder %s26, 0
      %p47 = por %p45, %p46
      %p48 = scmp.ne.s32.totalorder %s34, %s35
      %p49 = scmp.eq.s32.totalorder %s27, 1
      %p50 = por %p48, %p49
      %p52 = scmp.ne.s32.totalorder %s35, %s51
      %p53 = scmp.eq.s32.totalorder %s27, 0
      %p54 = por %p52, %p53
      %s55 = ssub.s32 %s21, %s28
      %p56 = scmp.eq.s32.totalorder %s55, 0
      %s58 = sadd.s32 %s57, 1
      %s59 = scalar_select %p56, %s57, %s58
      %p62 = pneg %p56
      %p63 = scmp.eq.s32.totalorder %s21, 1
      %p64 = por %p62, %p63
      %p65 = scmp.ne.s32.totalorder %s57, %s60
      %p66 = scmp.eq.s32.totalorder %s21, 0
      %p67 = por %p65, %p66
      %p68 = scmp.ne.s32.totalorder %s57, %s60
      %p69 = scmp.eq.s32.totalorder %s26, 1
      %p70 = por %p68, %p69
      %p71 = scmp.ne.s32.totalorder %s60, %s61
      %p72 = scmp.eq.s32.totalorder %s26, 0
      %p73 = por %p71, %p72
      %p74 = scmp.ne.s32.totalorder %s60, %s61
      %p75 = scmp.eq.s32.totalorder %s27, 1
      %p76 = por %p74, %p75
      %p78 = scmp.ne.s32.totalorder %s61, %s77
      %p79 = scmp.eq.s32.totalorder %s27, 0
      %p80 = por %p78, %p79
      %s81 = ssub.s32 %s21, %s28
      %p82 = scmp.eq.s32.totalorder %s81, 0
      %s84 = sadd.s32 %s83, 1
      %s85 = scalar_select %p82, %s83, %s84
      %p88 = pneg %p82
      %p89 = scmp.eq.s32.totalorder %s21, 1
      %p90 = por %p88, %p89
      %p91 = scmp.ne.s32.totalorder %s83, %s86
      %p92 = scmp.eq.s32.totalorder %s21, 0
      %p93 = por %p91, %p92
      %p94 = scmp.ne.s32.totalorder %s83, %s86
      %p95 = scmp.eq.s32.totalorder %s26, 1
      %p96 = por %p94, %p95
      %p97 = scmp.ne.s32.totalorder %s86, %s87
      %p98 = scmp.eq.s32.totalorder %s26, 0
      %p99 = por %p97, %p98
      %p100 = scmp.ne.s32.totalorder %s86, %s87
      %p101 = scmp.eq.s32.totalorder %s27, 1
      %p102 = por %p100, %p101
      %p104 = scmp.ne.s32.totalorder %s87, %s103
      %p105 = scmp.eq.s32.totalorder %s27, 0
      %p106 = por %p104, %p105
      %s108 = sadd.s32 %s107, 1
      %p111 = scmp.eq.s32.totalorder %s21, 1
      %p112 = scmp.ne.s32.totalorder %s107, %s109
      %p113 = scmp.eq.s32.totalorder %s21, 0
      %p114 = por %p112, %p113
      %p115 = scmp.ne.s32.totalorder %s107, %s109
      %p116 = scmp.eq.s32.totalorder %s26, 1
      %p117 = por %p115, %p116
      %p118 = scmp.ne.s32.totalorder %s109, %s110
      %p119 = scmp.eq.s32.totalorder %s26, 0
      %p120 = por %p118, %p119
      %p121 = scmp.ne.s32.totalorder %s109, %s110
      %p122 = scmp.eq.s32.totalorder %s27, 1
      %p123 = por %p121, %p122
      %p125 = scmp.ne.s32.totalorder %s110, %s124
      %p126 = scmp.eq.s32.totalorder %s27, 0
      %p127 = por %p125, %p126
      %s129 = sadd.s32 %s128, 1
      %p132 = scmp.eq.s32.totalorder %s21, 1
      %p133 = scmp.ne.s32.totalorder %s128, %s130
      %p134 = scmp.eq.s32.totalorder %s21, 0
      %p135 = por %p133, %p134
      %p136 = scmp.ne.s32.totalorder %s128, %s130
      %p137 = scmp.eq.s32.totalorder %s26, 1
      %p138 = por %p136, %p137
      %p139 = scmp.ne.s32.totalorder %s130, %s131
      %p140 = scmp.eq.s32.totalorder %s26, 0
      %p141 = por %p139, %p140
      %p142 = scmp.ne.s32.totalorder %s130, %s131
      %p143 = scmp.eq.s32.totalorder %s27, 1
      %p144 = por %p142, %p143
      %p146 = scmp.ne.s32.totalorder %s131, %s145
      %p147 = scmp.eq.s32.totalorder %s27, 0
      %p148 = por %p146, %p147
      %s150 = sadd.s32 %s149, 1
      %p153 = scmp.eq.s32.totalorder %s21, 1
      %p154 = scmp.ne.s32.totalorder %s149, %s151
      %p155 = scmp.eq.s32.totalorder %s21, 0
      %p156 = por %p154, %p155
      %p157 = scmp.ne.s32.totalorder %s149, %s151
      %p158 = scmp.eq.s32.totalorder %s26, 1
      %p159 = por %p157, %p158
      %p160 = scmp.ne.s32.totalorder %s151, %s152
      %p161 = scmp.eq.s32.totalorder %s26, 0
      %p162 = por %p160, %p161
      %p163 = scmp.ne.s32.totalorder %s151, %s152
      %p164 = scmp.eq.s32.totalorder %s27, 1
      %p165 = por %p163, %p164
      %p167 = scmp.ne.s32.totalorder %s152, %s166
      %p168 = scmp.eq.s32.totalorder %s27, 0
      %p169 = por %p167, %p168
      %s171 = sadd.s32 %s170, 1
      %p174 = scmp.eq.s32.totalorder %s21, 1
      %p175 = scmp.ne.s32.totalorder %s170, %s172
      %p176 = scmp.eq.s32.totalorder %s21, 0
      %p177 = por %p175, %p176
      %p178 = scmp.ne.s32.totalorder %s170, %s172
      %p179 = scmp.eq.s32.totalorder %s26, 1
      %p180 = por %p178, %p179
      %p181 = scmp.ne.s32.totalorder %s172, %s173
      %p182 = scmp.eq.s32.totalorder %s26, 0
      %p183 = por %p181, %p182
      %p184 = scmp.ne.s32.totalorder %s172, %s173
      %p185 = scmp.eq.s32.totalorder %s27, 1
      %p186 = por %p184, %p185
      %p188 = scmp.ne.s32.totalorder %s173, %s187
      %p189 = scmp.eq.s32.totalorder %s27, 0
      %p190 = por %p188, %p189
      %s192 = sadd.s32 %s191, 1
      %p195 = scmp.eq.s32.totalorder %s21, 1
      %p196 = scmp.ne.s32.totalorder %s191, %s193
      %p197 = scmp.eq.s32.totalorder %s21, 0
      %p198 = por %p196, %p197
      %p199 = scmp.ne.s32.totalorder %s191, %s193
      %p200 = scmp.eq.s32.totalorder %s26, 1
      %p201 = por %p199, %p200
      %p202 = scmp.ne.s32.totalorder %s193, %s194
      %p203 = scmp.eq.s32.totalorder %s26, 0
      %p204 = por %p202, %p203
      %p205 = scmp.ne.s32.totalorder %s193, %s194
      %p206 = scmp.eq.s32.totalorder %s27, 1
      %p207 = por %p205, %p206
      %p209 = scmp.ne.s32.totalorder %s194, %s208
      %p210 = scmp.eq.s32.totalorder %s27, 0
      %p211 = por %p209, %p210
      %s213 = sadd.s32 %s212, 1
      %p216 = scmp.eq.s32.totalorder %s21, 1
      %p217 = scmp.ne.s32.totalorder %s212, %s214
      %p218 = scmp.eq.s32.totalorder %s21, 0
      %p219 = por %p217, %p218
      %p220 = scmp.ne.s32.totalorder %s212, %s214
      %p221 = scmp.eq.s32.totalorder %s26, 1
      %p222 = por %p220, %p221
      %p223 = scmp.ne.s32.totalorder %s214, %s215
      %p224 = scmp.eq.s32.totalorder %s26, 0
      %p225 = por %p223, %p224
      %p226 = scmp.ne.s32.totalorder %s214, %s215
      %p227 = scmp.eq.s32.totalorder %s27, 1
      %p228 = por %p226, %p227
      %p230 = scmp.ne.s32.totalorder %s215, %s229
      %p231 = scmp.eq.s32.totalorder %s27, 0
      %p232 = por %p230, %p231
      %s234 = sadd.s32 %s233, 1
      %p237 = scmp.eq.s32.totalorder %s21, 1
      %p238 = scmp.ne.s32.totalorder %s233, %s235
      %p239 = scmp.eq.s32.totalorder %s21, 0
      %p240 = por %p238, %p239
      %p241 = scmp.ne.s32.totalorder %s233, %s235
      %p242 = scmp.eq.s32.totalorder %s26, 1
      %p243 = por %p241, %p242
      %p244 = scmp.ne.s32.totalorder %s235, %s236
      %p245 = scmp.eq.s32.totalorder %s26, 0
      %p246 = por %p244, %p245
      %p247 = scmp.ne.s32.totalorder %s235, %s236
      %p248 = scmp.eq.s32.totalorder %s27, 1
      %p249 = por %p247, %p248
      %p251 = scmp.ne.s32.totalorder %s236, %s250
      %p252 = scmp.eq.s32.totalorder %s27, 0
      %p253 = por %p251, %p252
      %s254 = ssub.s32 %s21, %s28
      %p255 = scmp.eq.s32.totalorder %s254, 0
      %s257 = sadd.s32 %s256, 1
      %s258 = scalar_select %p255, %s256, %s257
      %p261 = pneg %p255
      %p262 = scmp.eq.s32.totalorder %s21, 1
      %p263 = por %p261, %p262
      %p264 = scmp.ne.s32.totalorder %s256, %s259
      %p265 = scmp.eq.s32.totalorder %s21, 0
      %p266 = por %p264, %p265
      %p267 = scmp.ne.s32.totalorder %s256, %s259
      %p268 = scmp.eq.s32.totalorder %s26, 1
      %p269 = por %p267, %p268
      %p270 = scmp.ne.s32.totalorder %s259, %s260
      %p271 = scmp.eq.s32.totalorder %s26, 0
      %p272 = por %p270, %p271
      %p273 = scmp.ne.s32.totalorder %s259, %s260
      %p274 = scmp.eq.s32.totalorder %s27, 1
      %p275 = por %p273, %p274
      %p277 = scmp.ne.s32.totalorder %s260, %s276
      %p278 = scmp.eq.s32.totalorder %s27, 0
      %p279 = por %p277, %p278
      %s280 = ssub.s32 %s21, %s28
      %p281 = scmp.eq.s32.totalorder %s280, 0
      %s283 = sadd.s32 %s282, 1
      %s284 = scalar_select %p281, %s282, %s283
      %p287 = pneg %p281
      %p288 = scmp.eq.s32.totalorder %s21, 1
      %p289 = por %p287, %p288
      %p290 = scmp.ne.s32.totalorder %s282, %s285
      %p291 = scmp.eq.s32.totalorder %s21, 0
      %p292 = por %p290, %p291
      %p293 = scmp.ne.s32.totalorder %s282, %s285
      %p294 = scmp.eq.s32.totalorder %s26, 1
      %p295 = por %p293, %p294
      %p296 = scmp.ne.s32.totalorder %s285, %s286
      %p297 = scmp.eq.s32.totalorder %s26, 0
      %p298 = por %p296, %p297
      %p299 = scmp.ne.s32.totalorder %s285, %s286
      %p300 = scmp.eq.s32.totalorder %s27, 1
      %p301 = por %p299, %p300
      %p303 = scmp.ne.s32.totalorder %s286, %s302
      %p304 = scmp.eq.s32.totalorder %s27, 0
      %p305 = por %p303, %p304
      %p306 = scmp.le.s32.totalorder 1, %s21
      %p307 = scmp.lt.s32.totalorder %s21, 3
      %p308 = pnand %p306, %p307
      %p309 = pneg %p308
      // Predicated region
      $region9: #{reinforce_forward.1} parent=5 // pred_check
        _
      $region10: #{reinforce_forward.1} parent=5 // pred_check_branch
        %311 = sbr.rel (%p308) target = $region12
      $region11: #{reinforce_forward.1} parent=5 // pred_region
        %s312 = ssub.s32 %s21, 1
        // Predicated region
        $region13: #{reinforce_forward.1} parent=11 // pred_check
          %p313 = pneg %p120
        $region14: #{reinforce_forward.1} parent=11 // pred_check_branch
          %315 = sbr.rel (%p313) target = $region16
        $region15: #{reinforce_forward.1} parent=11 // pred_region
          _
        $region16: #{reinforce_forward.1} parent=11 // pred_fallthru
          _
        // Predicated region
        $region17: #{reinforce_forward.1} parent=11 // pred_check
          %p316 = pneg %p141
        $region18: #{reinforce_forward.1} parent=11 // pred_check_branch
          %318 = sbr.rel (%p316) target = $region20
        $region19: #{reinforce_forward.1} parent=11 // pred_region
          _
        $region20: #{reinforce_forward.1} parent=11 // pred_fallthru
          _
        // Predicated region
        $region21: #{reinforce_forward.1} parent=11 // pred_check
          %p319 = pneg %p162
        $region22: #{reinforce_forward.1} parent=11 // pred_check_branch
          %321 = sbr.rel (%p319) target = $region24
        $region23: #{reinforce_forward.1} parent=11 // pred_region
          _
        $region24: #{reinforce_forward.1} parent=11 // pred_fallthru
          _
        // Predicated region
        $region25: #{reinforce_forward.1} parent=11 // pred_check
          %p322 = pneg %p183
        $region26: #{reinforce_forward.1} parent=11 // pred_check_branch
          %324 = sbr.rel (%p322) target = $region28
        $region27: #{reinforce_forward.1} parent=11 // pred_region
          _
        $region28: #{reinforce_forward.1} parent=11 // pred_fallthru
          _
        // Predicated region
        $region29: #{reinforce_forward.1} parent=11 // pred_check
          %p325 = pneg %p204
        $region30: #{reinforce_forward.1} parent=11 // pred_check_branch
          %327 = sbr.rel (%p325) target = $region32
        $region31: #{reinforce_forward.1} parent=11 // pred_region
          _
        $region32: #{reinforce_forward.1} parent=11 // pred_fallthru
          _
        // Predicated region
        $region33: #{reinforce_forward.1} parent=11 // pred_check
          %p328 = pneg %p225
        $region34: #{reinforce_forward.1} parent=11 // pred_check_branch
          %330 = sbr.rel (%p328) target = $region36
        $region35: #{reinforce_forward.1} parent=11 // pred_region
          _
        $region36: #{reinforce_forward.1} parent=11 // pred_fallthru
          _
        // Predicated region
        $region37: #{reinforce_forward.1} parent=11 // pred_check
          %p331 = pneg %p246
        $region38: #{reinforce_forward.1} parent=11 // pred_check_branch
          %333 = sbr.rel (%p331) target = $region40
        $region39: #{reinforce_forward.1} parent=11 // pred_region
          _
        $region40: #{reinforce_forward.1} parent=11 // pred_fallthru
          _
      $region12: #{reinforce_forward.1} parent=5 // pred_fallthru
        _
      %p334 = scmp.lt.s32.totalorder %s21, 2
      // Predicated region
      $region41: #{reinforce_forward.1} parent=5 // pred_check
        %p335 = pneg %p334
      $region42: #{reinforce_forward.1} parent=5 // pred_check_branch
        %337 = sbr.rel (%p335) target = $region44
      $region43: #{reinforce_forward.1} parent=5 // pred_region
        // Predicated region
        $region45: #{reinforce_forward.1} parent=43 // pred_check
          %p338 = pneg %p41
        $region46: #{reinforce_forward.1} parent=43 // pred_check_branch
          %340 = sbr.rel (%p338) target = $region48
        $region47: #{reinforce_forward.1} parent=43 // pred_region
          %p341 = scmp.lt.s32.totalorder %s21, 1
          %s342 = scalar_select %p341, %s21, 1
          %s343 = smul.addr %s342, 4
          %s344 = scalar_lea.vmem %s0, %s343
        $region48: #{reinforce_forward.1} parent=43 // pred_fallthru
          _
        // Predicated region
        $region49: #{reinforce_forward.1} parent=43 // pred_check
          %p345 = pneg %p67
        $region50: #{reinforce_forward.1} parent=43 // pred_check_branch
          %347 = sbr.rel (%p345) target = $region52
        $region51: #{reinforce_forward.1} parent=43 // pred_region
          %p348 = scmp.lt.s32.totalorder %s21, 1
          %s349 = scalar_select %p348, %s21, 1
          %s350 = scalar_lea.vmem %s1, %s349
        $region52: #{reinforce_forward.1} parent=43 // pred_fallthru
          _
        // Predicated region
        $region53: #{reinforce_forward.1} parent=43 // pred_check
          %p351 = pneg %p93
        $region54: #{reinforce_forward.1} parent=43 // pred_check_branch
          %353 = sbr.rel (%p351) target = $region56
        $region55: #{reinforce_forward.1} parent=43 // pred_region
          %p354 = scmp.lt.s32.totalorder %s21, 1
          %s355 = scalar_select %p354, %s21, 1
          %s356 = scalar_lea.vmem %s2, %s355
        $region56: #{reinforce_forward.1} parent=43 // pred_fallthru
          _
      $region44: #{reinforce_forward.1} parent=5 // pred_fallthru
        _
      %p357 = scmp.le.s32.totalorder 1, %s21
      %p358 = scmp.lt.s32.totalorder %s21, 3
      %p359 = pnand %p357, %p358
      %p360 = pneg %p359
      // Predicated region
      $region57: #{reinforce_forward.1} parent=5 // pred_check
        _
      $region58: #{reinforce_forward.1} parent=5 // pred_check_branch
        %362 = sbr.rel (%p359) target = $region60
      $region59: #{reinforce_forward.1} parent=5 // pred_region
        %s363 = ssub.s32 %s21, 1
        %p364 = scmp.lt.s32.totalorder %s26, 1
        %s365 = scalar_select %p364, %s26, 1
        %s366 = smul.addr %s365, 4
        %s367 = scalar_lea.vmem %s0, %s366
        %p368 = pneg %p47
        %p369 = pneg %p44
        %p370 = scmp.lt.s32.totalorder %s26, 1
        %s371 = scalar_select %p370, %s26, 1
        %s372 = scalar_lea.vmem %s1, %s371
        %p373 = pneg %p73
        %p374 = pneg %p70
        %p375 = scmp.lt.s32.totalorder %s26, 1
        %s376 = scalar_select %p375, %s26, 1
        %s377 = scalar_lea.vmem %s2, %s376
        %p378 = pneg %p99
        %p379 = pneg %p96
        %p380 = pneg %p120
        %p381 = pneg %p117
        %p382 = pneg %p141
        %p383 = pneg %p138
        %p384 = pneg %p162
        %p385 = pneg %p159
        %p386 = pneg %p183
        %p387 = pneg %p180
        %p388 = pneg %p204
        %p389 = pneg %p201
        %p390 = pneg %p225
        %p391 = pneg %p222
        %p392 = pneg %p246
        %p393 = pneg %p243
        %p394 = pneg %p272
        %p395 = pneg %p269
        %s396 = sand.u32 %s259, 1
        %s397 = scalar_lea.sflag [#allocation3], %s396
        %s398 = sand.u32 %s259, 1
        %s399 = scalar_lea.vmem [#allocation2], %s398
        %p400 = pneg %p298
        %p401 = pneg %p295
        %p402 = scmp.lt.s32.totalorder %s26, 1
        %s403 = scalar_select %p402, %s26, 1
        %s404 = scalar_lea.vmem %s11, %s403
        %p405 = scmp.lt.s32.totalorder %s26, 1
        %s406 = scalar_select %p405, %s26, 1
        %s407 = smul.addr %s406, 4
        %s408 = scalar_lea.vmem %s0, %s407
        %p409 = scmp.lt.s32.totalorder %s26, 1
        %s410 = scalar_select %p409, %s26, 1
        %s411 = scalar_lea.vmem %s1, %s410
        %p412 = scmp.lt.s32.totalorder %s26, 1
        %s413 = scalar_select %p412, %s26, 1
        %s414 = scalar_lea.vmem %s2, %s413
        %p415 = scmp.lt.s32.totalorder %s26, 1
        %s416 = scalar_select %p415, %s26, 1
        %s417 = scalar_lea.vmem %s11, %s416
        %v418 = vld [vmem:[%s408] sm:$0xf]
        %v419 = vld [vmem:[%s4] sm:$0xff]
        %v420 = vld [vmem:[%s4 + $0x8] sm:$0xff]
        %v421 = vld [vmem:[%s5] sm:$0xff]
        %v422 = vld [vmem:[%s5 + $0x8] sm:$0xff]
        %424 = vset.pattern.permute.xlu0 0
        %425 = vperm.xlu0 %424, %v421
        %v426 = vpop.permute.xlu0 %425
        %429 = vset.pattern.permute.xlu0 0
        %430 = vperm.xlu0 %429, %v422
        %v431 = vpop.permute.xlu0 %430
        %vm433 = vcmask 31744
        %v435 = vsel %vm433, %v419, 0
        %v438 = vsel %vm433, %v420, 0
        %vm440 = vcmask 1043456
        %v442 = vsel %vm440, %v418, 0
        %444 = vmatpush.msra.mxu0 0.0
        %445 = vmatpush.msra.mxu0 0.0
        %446 = vmatpush.msra.mxu0 0.0
        %447 = vmatpush.msra.mxu0 0.0
        %448 = vmatpush.msra.mxu0 0.0
        %449 = vmatpush.msra.mxu0 0.0
        %450 = vmatpush.msra.mxu0 0.0
        %451 = vmatpush.msra.mxu0 0.0
        %452 = vmatpush.msra.mxu0 0.0
        %453 = vmatpush.msra.mxu0 0.0
        %454 = vmatpush.msra.mxu0 0.0
        %455 = vmatpush.msra.mxu0 0.0
        %456 = vmatpush.msra.mxu0 0.0
        %457 = vmatpush.msra.mxu0 0.0
        %458 = vmatpush.msra.mxu0 0.0
        %459 = vmatpush.msra.mxu0 %v442
        %460 = vmatmul.f32.gmra.mxu0 %v435
        %v461 = vpop.f32.mrf.mxu0
        %v462 = vadd.f32 %v426, %v461
        %463 = vmatmul.f32.gmra.mxu0 %v438
        %v464 = vpop.f32.mrf.mxu0
        %v465 = vadd.f32 %v431, %v464
        %466 = vdwg.mxu0
        %vm467 = vcmp.gt.f32.partialorder %v462, 0.0
        %vm468 = vcmp.gt.f32.partialorder %v465, 0.0
        %v469 = vmul.f32 %v462, 0.01
        %v470 = vmul.f32 %v465, 0.01
        %v471 = vsel %vm467, %v462, %v469
        %v472 = vsel %vm468, %v465, %v470
        %v473 = vld [vmem:[%s6] sm:$0xff]
        %v474 = vld [vmem:[%s6 + $0x8] sm:$0xff]
        %v475 = vld [vmem:[%s6 + $0x10] sm:$0xff]
        %v476 = vld [vmem:[%s6 + $0x18] sm:$0xff]
        %v477 = vld [vmem:[%s7] sm:$0xff]
        %v478 = vld [vmem:[%s7 + $0x8] sm:$0xff]
        %v479 = vld [vmem:[%s7 + $0x10] sm:$0xff]
        %v480 = vld [vmem:[%s7 + $0x18] sm:$0xff]
        %482 = vset.pattern.permute.xlu0 0
        %483 = vperm.xlu0 %482, %v477
        %v484 = vpop.permute.xlu0 %483
        %487 = vset.pattern.permute.xlu0 0
        %488 = vperm.xlu0 %487, %v478
        %v489 = vpop.permute.xlu0 %488
        %492 = vset.pattern.permute.xlu0 0
        %493 = vperm.xlu0 %492, %v479
        %v494 = vpop.permute.xlu0 %493
        %497 = vset.pattern.permute.xlu0 0
        %498 = vperm.xlu0 %497, %v480
        %v499 = vpop.permute.xlu0 %498
        %vm501 = vcmask 130048
        %v503 = vsel %vm501, %v473, 0
        %v506 = vsel %vm501, %v474, 0
        %v509 = vsel %vm501, %v475, 0
        %v512 = vsel %vm501, %v476, 0
        %514 = vmatpush.msra.mxu0 0.0
        %515 = vmatpush.msra.mxu0 0.0
        %516 = vmatpush.msra.mxu0 0.0
        %517 = vmatpush.msra.mxu0 0.0
        %518 = vmatpush.msra.mxu0 0.0
        %519 = vmatpush.msra.mxu0 0.0
        %520 = vmatpush.msra.mxu0 0.0
        %521 = vmatpush.msra.mxu0 0.0
        %522 = vmatpush.msra.mxu0 0.0
        %523 = vmatpush.msra.mxu0 0.0
        %524 = vmatpush.msra.mxu0 0.0
        %525 = vmatpush.msra.mxu0 0.0
        %526 = vmatpush.msra.mxu0 0.0
        %527 = vmatpush.msra.mxu0 0.0
        %528 = vmatpush.msra.mxu0 %v472
        %529 = vmatpush.msra.mxu0 %v471
        %530 = vmatmul.f32.gmra.mxu0 %v503
        %v531 = vpop.f32.mrf.mxu0
        %v532 = vadd.f32 %v484, %v531
        %533 = vmatmul.f32.gmra.mxu0 %v506
        %v534 = vpop.f32.mrf.mxu0
        %v535 = vadd.f32 %v489, %v534
        %536 = vmatmul.f32.gmra.mxu0 %v509
        %v537 = vpop.f32.mrf.mxu0
        %v538 = vadd.f32 %v494, %v537
        %539 = vmatmul.f32.gmra.mxu0 %v512
        %v540 = vpop.f32.mrf.mxu0
        %v541 = vadd.f32 %v499, %v540
        %542 = vdwg.mxu0
        %vm543 = vcmp.gt.f32.partialorder %v532, 0.0
        %vm544 = vcmp.gt.f32.partialorder %v535, 0.0
        %vm545 = vcmp.gt.f32.partialorder %v538, 0.0
        %vm546 = vcmp.gt.f32.partialorder %v541, 0.0
        %v547 = vmul.f32 %v532, 0.01
        %v548 = vmul.f32 %v535, 0.01
        %v549 = vmul.f32 %v538, 0.01
        %v550 = vmul.f32 %v541, 0.01
        %v551 = vsel %vm543, %v532, %v547
        %v552 = vsel %vm544, %v535, %v548
        %v553 = vsel %vm545, %v538, %v549
        %v554 = vsel %vm546, %v541, %v550
        %v555 = vld [vmem:[%s8] sm:$0x3]
        %v556 = vld [vmem:[%s9] sm:$0x3]
        %558 = vset.pattern.permute.xlu0 0
        %559 = vperm.xlu0 %558, %v556
        %v560 = vpop.permute.xlu0 %559
        %vm562 = vcmask 261120
        %v564 = vsel %vm562, %v555, 0
        %566 = vmatpush.msra.mxu0 0.0
        %567 = vmatpush.msra.mxu0 0.0
        %568 = vmatpush.msra.mxu0 0.0
        %569 = vmatpush.msra.mxu0 0.0
        %570 = vmatpush.msra.mxu0 0.0
        %571 = vmatpush.msra.mxu0 0.0
        %572 = vmatpush.msra.mxu0 0.0
        %573 = vmatpush.msra.mxu0 0.0
        %574 = vmatpush.msra.mxu0 0.0
        %575 = vmatpush.msra.mxu0 0.0
        %576 = vmatpush.msra.mxu0 0.0
        %577 = vmatpush.msra.mxu0 0.0
        %578 = vmatpush.msra.mxu0 %v554
        %579 = vmatpush.msra.mxu0 %v553
        %580 = vmatpush.msra.mxu0 %v552
        %581 = vmatpush.msra.mxu0 %v551
        %582 = vmatmul.f32.gmra.mxu0 %v564
        %v583 = vpop.f32.mrf.mxu0
        %v584 = vadd.f32 %v560, %v583
        %585 = vdwg.mxu0
        %v586 = vadd.f32 %v584, 1e-06
        %vm587 = vcmp.gt.f32.partialorder %v584, 0.0
        %v588 = vsel %vm587, %v584, 0.0
        %v589 = vand.u32 2147483647, %v584
        %v590 = vsub.f32 0.0, %v589
        %v591 = vmul.f32 %v590, 1.442695
        %v592 = vpow.pop %v591
        %v593 = vadd.f32 %v592, 1.0
        %v594 = vlog2.pop %v593
        %v595 = vmul.f32 %v594, 0.6931472
        %v596 = vmul.f32 -0.5, %v592
        %v597 = vadd.f32 %v596, 1.0
        %v598 = vmul.f32 %v597, %v592
        %v599 = vand.u32 2147483647, %v592
        %vm600 = vcmp.lt.f32.partialorder %v599, 0.0004427343
        %v601 = vsel %vm600, %v598, %v595
        %v602 = vadd.f32 %v588, %v601
        %v603 = vadd.f32 %v602, 1e-06
        %v604 = vld [vmem:[%s411] sm:$0x1]
        %v605 = vsub.f32 %v604, %v586
        %v606 = vmul.f32 %v605, %v605
        %v607 = vsub.f32 0.0, %v606
        %v608 = vmul.f32 %v603, 2.0
        %v609 = vmul.f32 %v608, %v603
        %611 = vst [vmem:[#allocation1] sm:$0xff] %v609
        %s612 = scalar_lea.vmem [#allocation1], 1
        %v613 = vld [vmem:[%s612] ss:$9 sm:$0xff]
        %v615 = vrcp.pop %v613
        %v616 = vmul.f32 %v613, %v615
        %v617 = vsub.f32 1.0, %v616
        %v618 = vmul.f32 %v615, %v617
        %v619 = vadd.f32 %v615, %v618
        %vm620 = vweird.f32 %v613
        %vm621 = vweird.f32 %v615
        %vm622 = vmor %vm620, %vm621
        %v623 = vsel %vm622, %v615, %v619
        %v624 = vand.u32 2147483647, %v613
        %vm625 = vcmp.eq.f32.partialorder %v624, 8.507059e+37
        %v626 = vand.u32 %v613, 2147483648
        %v627 = vor.u32 1.1754944e-38, %v626
        %v628 = vsel %vm625, %v627, %v623
        %v629 = vmul.f32 %v607, %v628
        %v630 = vlog2.pop %v603
        %v631 = vmul.f32 %v630, 0.6931472
        %633 = vst [vmem:[#allocation1] sm:$0xff] %v631
        %s634 = scalar_lea.vmem [#allocation1], 1
        %v635 = vld [vmem:[%s634] ss:$9 sm:$0xff]
        %v637 = vsub.f32 %v629, %v635
        %v638 = vsub.f32 %v637, 0.9189385
        %vm639 = vcmask 57344
        %640 = vst.msk [vmem:[%s399] sm:$0x1] %vm639, %v638
        %v641 = vld [vmem:[%s414] sm:$0x1]
        %v642 = vld [vmem:[%s3] sm:$0xff]
        %vm643 = vcmask 64512
        %v645 = vsel %vm643, %v641, 0
        %647 = vmatpush.msra.mxu0 0.0
        %648 = vmatpush.msra.mxu0 0.0
        %649 = vmatpush.msra.mxu0 0.0
        %650 = vmatpush.msra.mxu0 0.0
        %651 = vmatpush.msra.mxu0 0.0
        %652 = vmatpush.msra.mxu0 0.0
        %653 = vmatpush.msra.mxu0 0.0
        %654 = vmatpush.msra.mxu0 0.0
        %655 = vmatpush.msra.mxu0 0.0
        %656 = vmatpush.msra.mxu0 0.0
        %657 = vmatpush.msra.mxu0 0.0
        %658 = vmatpush.msra.mxu0 0.0
        %659 = vmatpush.msra.mxu0 0.0
        %660 = vmatpush.msra.mxu0 0.0
        %661 = vmatpush.msra.mxu0 0.0
        %662 = vmatpush.msra.mxu0 %v642
        %663 = vmatmul.f32.gmra.mxu0 %v645
        %v664 = vpop.f32.mrf.mxu0
        %v665 = vadd.f32 0.0, %v664
        %666 = vdwg.mxu0
        %v667 = vmul.f32 %v638, %v665
        %v668 = vsel %vm639, %v667, 0.0
        %669 = vadd.xlane.f32.xlu0 %v668
        %v670 = vpop.xlane.xlu0 %669
        %v671 = vrot.slane %v670, 4
        %v672 = vadd.f32 %v670, %v671
        %v673 = vrot.slane %v672, 2
        %v674 = vadd.f32 %v672, %v673
        %v675 = vrot.slane %v674, 1
        %v676 = vadd.f32 %v674, %v675
        %s677 = vtos %v676
        %s678 = ssub.f32 0.0, %s677
        %s679 = smul.f32 %s678, 0.125
        %v680 = vstv %s679
        %vm681 = vcmask 0
        %682 = vst.msk [vmem:[%s417] sm:$0x1] %vm681, %v680
        %s683 = sand.u32 %s259, 1
        %s684 = scalar_lea.sflag [#allocation3], %s683
        %s685 = sand.u32 %s259, 1
        %s686 = scalar_lea.vmem [#allocation2], %s685
        %p687 = scmp.lt.s32.totalorder %s26, 1
        %s688 = scalar_select %p687, %s26, 1
        %s689 = scalar_lea.vmem %s11, %s688
        // Predicated region
        $region61: #{reinforce_forward.1} parent=59 // pred_check
          %p690 = pneg %p269
        $region62: #{reinforce_forward.1} parent=59 // pred_check_branch
          %692 = sbr.rel (%p690) target = $region64
        $region63: #{reinforce_forward.1} parent=59 // pred_region
          %694 = vsyncadd %s684, 0
          %s695 = scalar_lea.hbm %s10, %s26
          %s697 = sshll.u32 %s686, 4
          %s698 = int_to_ptr.vmem [resolvable:$true] %s697
          %s699 = sshll.u32 %s695, 4
          %s700 = int_to_ptr.hbm [resolvable:$true] %s699
          %702 = dma.vmem_to_hbm [thread:$0]  %s698, 16, %s700, %s684
        $region64: #{reinforce_forward.1} parent=59 // pred_fallthru
          _
        // Predicated region
        $region65: #{reinforce_forward.1} parent=59 // pred_check
          %p703 = pneg %p295
        $region66: #{reinforce_forward.1} parent=59 // pred_check_branch
          %705 = sbr.rel (%p703) target = $region68
        $region67: #{reinforce_forward.1} parent=59 // pred_region
          _
        $region68: #{reinforce_forward.1} parent=59 // pred_fallthru
          _
      $region60: #{reinforce_forward.1} parent=5 // pred_fallthru
        _
      %p706 = scmp.le.s32.totalorder 2, %s21
      // Predicated region
      $region69: #{reinforce_forward.1} parent=5 // pred_check
        %p707 = pneg %p706
      $region70: #{reinforce_forward.1} parent=5 // pred_check_branch
        %709 = sbr.rel (%p707) target = $region72
      $region71: #{reinforce_forward.1} parent=5 // pred_region
        %s710 = ssub.s32 %s21, 2
        // Predicated region
        $region73: #{reinforce_forward.1} parent=71 // pred_check
          %p711 = pneg %p275
        $region74: #{reinforce_forward.1} parent=71 // pred_check_branch
          %713 = sbr.rel (%p711) target = $region76
        $region75: #{reinforce_forward.1} parent=71 // pred_region
          %s714 = sand.u32 %s260, 1
          %s715 = scalar_lea.sflag [#allocation3], %s714
          %s716 = sand.u32 %s260, 1
          %s717 = scalar_lea.vmem [#allocation2], %s716
          %719 = dma.done %s715, 16
        $region76: #{reinforce_forward.1} parent=71 // pred_fallthru
          _
        // Predicated region
        $region77: #{reinforce_forward.1} parent=71 // pred_check
          %p720 = pneg %p301
        $region78: #{reinforce_forward.1} parent=71 // pred_check_branch
          %722 = sbr.rel (%p720) target = $region80
        $region79: #{reinforce_forward.1} parent=71 // pred_region
          %p723 = scmp.lt.s32.totalorder %s27, 1
          %s724 = scalar_select %p723, %s27, 1
          %s725 = scalar_lea.vmem %s11, %s724
        $region80: #{reinforce_forward.1} parent=71 // pred_fallthru
          _
      $region72: #{reinforce_forward.1} parent=5 // pred_fallthru
        _
    $region6: #{reinforce_forward.1} parent=1 // loop_footer
      %s25 = sadd.s32 1, %s21
    $region7: #{reinforce_forward.1} parent=1 // loop_footer_branch
      %20 = sbr.rel target = $region3
    $region8: #{reinforce_forward.1} parent=1 // loop_exit
      _
    %726 = vsyncpa [#allocation3], 1
    %s727 = scalar_lea.sflag [#allocation3], 1
    %728 = vsyncpa %s727, 1

</llo_original>
